<compile_context>
chip_gen: v7x
topology: tpu7x:2x2x1
jax: 0.10.0
libtpu: 0.0.40
codegen_flags: <defaults>
</compile_context>

<pallas_src>
import functools

import jax
import jax.numpy as jnp
from jax.experimental import pallas as pl
from jax.experimental.pallas import tpu as pltpu

_MAX_TILE_ROWS = 2048


def _round_up(x, m):
    return (x + m - 1) // m * m


def _vmem_budgets():
    """(f32 block-byte budget, scoped-VMEM request) for this TPU generation."""
    try:
        cap = int(pltpu.get_tpu_info().vmem_capacity_bytes)
    except Exception:  # no TPU info available -> assume the small (64 MiB) part
        cap = 64 * 1024 * 1024
    if cap >= 96 * 1024 * 1024:          # v5e / v6e class: 128 MiB physical VMEM
        return 14 * 1024 * 1024, min(96 * 1024 * 1024, (cap * 3) // 4)
    # v7x class: 64 MiB per TensorCore; leave room for the f32 intermediates.
    return 5 * 1024 * 1024, min(40 * 1024 * 1024, (cap * 3) // 4)


def _pick_tile_rows(n_rows, vocab, in_itemsize, block_f32_bytes, vmem_limit):
    # Target size of one f32-equivalent logits block.
    rows = block_f32_bytes // (vocab * 4)
    # Total-footprint clamp: double-buffered input block (input dtype) plus
    # ~4 live (TR, V) f32 intermediates plus the lane-padded target buffers.
    per_row = vocab * (2 * in_itemsize + 4 * 4) + 2 * 128 * 4
    rows = min(rows, int(vmem_limit * 0.85) // per_row)
    rows = max(8, (rows // 8) * 8)
    rows = min(rows, _MAX_TILE_ROWS, _round_up(n_rows, 8))
    return int(rows)


def _ce_partial_kernel(logits_ref, tgt_ref, out_ref, *, num_valid_rows,
                       needs_row_mask, use_mxu_reduce):
    """Writes the summed per-row cross-entropy of this row-tile to out_ref."""
    x_raw = logits_ref[...]                                    # (TR, V), input dtype
    tr, v = x_raw.shape

    # Row max in the raw dtype (bf16 packs 2x per vreg); exact under the cast.
    m = jnp.max(x_raw, axis=-1, keepdims=True).astype(jnp.float32)   # (TR, 1)
    shifted = x_raw.astype(jnp.float32) - m                    # (TR, V), all <= 0

    # Fused target gather:  CE = log(sum(exp(shifted))) - shifted[tgt]
    # (the 'm' terms of lse - x[tgt] cancel).  Out-of-range target ids select
    # nothing -> row contributes the full log-sum-exp (PyTorch would raise).
    tgt = tgt_ref[...]                                         # (TR, 1) int32
    cols = jax.lax.broadcasted_iota(jnp.int32, shifted.shape, 1)
    exp_s = jnp.exp(shifted)                                   # (TR, V) f32, <= 1
    picked_s = jnp.where(cols == tgt, shifted, 0.0)            # (TR, V) f32

    if use_mxu_reduce:
        # Lane-axis sums on the otherwise-idle MXU; frees the XLU/VPU slots
        # that become the bottleneck once HBM stops being the limiter
        # (v7x's 3.2 TB/s, or bf16 inputs on v6e).
        ones = jnp.ones((v, 1), jnp.float32)
        sum_exp = jnp.dot(exp_s, ones, preferred_element_type=jnp.float32)
        picked = jnp.dot(picked_s, ones, preferred_element_type=jnp.float32)
    else:
        sum_exp = jnp.sum(exp_s, axis=-1, keepdims=True)
        picked = jnp.sum(picked_s, axis=-1, keepdims=True)

    per_row_ce = jnp.log(sum_exp) - picked                     # (TR, 1)

    if needs_row_mask:
        # Ragged final block: rows past num_valid_rows hold unspecified data;
        # select (not multiply) so NaN/Inf cannot leak through.
        row = (jax.lax.broadcasted_iota(jnp.int32, (tr, 1), 0)
               + pl.program_id(0) * tr)
        per_row_ce = jnp.where(row < num_valid_rows, per_row_ce, 0.0)

    out_ref[0] = jnp.sum(per_row_ce, axis=0, keepdims=True)    # (1, 1)


@jax.jit
def language_model_criterion(logits, target, mask):
    """
    logits: (M, V) float (f32 or bf16), M == N * seq_len
    target: (N, seq_len) int
    mask:   (N, seq_len) float
    returns: scalar float32 loss = mean(CE over rows) * sum(mask) / N
    """
    M, V = logits.shape
    N, T = target.shape
    Tc = min(T, V)                                  # target[:, :logits.shape[1]]
    target_c = target[:, :Tc].reshape(-1).astype(jnp.int32)
    mask_c = mask[:, :Tc].reshape(-1).astype(jnp.float32)
    assert target_c.shape[0] == M, "target.view(-1) must match logits rows"

    # sum(mask) never touches logits -> plain JAX, not the kernel.
    mask_sum = jnp.sum(mask_c)

    # (M, 1) target: each tile's HBM read is contiguous and ~V x smaller than
    # the logits stream (only the VMEM destination is lane-padded).
    tgt2d = target_c.reshape(M, 1)

    in_itemsize = jnp.dtype(logits.dtype).itemsize
    block_f32_bytes, vmem_limit = _vmem_budgets()
    tile_rows = _pick_tile_rows(M, V, in_itemsize, block_f32_bytes, vmem_limit)
    num_tiles = pl.cdiv(M, tile_rows)
    needs_row_mask = (M % tile_rows) != 0
    use_mxu_reduce = (V % 128 == 0)

    kernel = functools.partial(
        _ce_partial_kernel, num_valid_rows=M, needs_row_mask=needs_row_mask,
        use_mxu_reduce=use_mxu_reduce)

    partials = pl.pallas_call(
        kernel,
        out_shape=jax.ShapeDtypeStruct((num_tiles, 1, 1), jnp.float32),
        grid_spec=pltpu.PrefetchScalarGridSpec(
            num_scalar_prefetch=0,
            grid=(num_tiles,),
            in_specs=[
                pl.BlockSpec((tile_rows, V), lambda i: (i, 0)),
                pl.BlockSpec((tile_rows, 1), lambda i: (i, 0)),
            ],
            out_specs=pl.BlockSpec((1, 1, 1), lambda i: (i, 0, 0)),
        ),
        compiler_params=pltpu.CompilerParams(
            dimension_semantics=("parallel",),
            vmem_limit_bytes=vmem_limit),
    )(logits, tgt2d)

    loss_mean = jnp.sum(partials) / jnp.float32(M)   # CrossEntropyLoss 'mean'
    return loss_mean * mask_sum / jnp.float32(N)


def _reference(logits, target, mask):
    """Pure-JAX reference matching the PyTorch forward."""
    M, V = logits.shape
    N, T = target.shape
    Tc = min(T, V)
    tgt = target[:, :Tc].reshape(-1).astype(jnp.int32)
    msk = mask[:, :Tc].reshape(-1).astype(jnp.float32)
    logp = jax.nn.log_softmax(logits.astype(jnp.float32), axis=-1)
    per_row = -jnp.take_along_axis(logp, tgt[:, None], axis=-1)[:, 0]
    return jnp.mean(per_row) * jnp.sum(msk) / N


def _run_case(name, key, N, T, V, dtype, rtol, atol):
    k1, k2, k3 = jax.random.split(key, 3)
    M = N * T
    logits = jax.random.normal(k1, (M, V), dtype=jnp.float32).astype(dtype)
    target = jax.random.randint(k2, (N, T), 0, V, dtype=jnp.int32)
    mask = (jax.random.uniform(k3, (N, T)) > 0.3).astype(jnp.float32)

    out = jax.block_until_ready(language_model_criterion(logits, target, mask))
    ref = _reference(logits, target, mask)
    assert jnp.allclose(out, ref, rtol=rtol, atol=atol), (name, out, ref)


if __name__ == "__main__":
    root = jax.random.PRNGKey(0)
    k1, k2, k3 = jax.random.split(root, 3)
    # Small-V case: XLU lane-reduce path, single aligned tile.
    _run_case("f32_v32", k1, 2, 8, 32, jnp.float32, 1e-5, 1e-5)
    # 128-aligned V: MXU lane-reduce path; T=7 exercises the ragged row mask.
    _run_case("f32_v256_ragged", k2, 2, 7, 256, jnp.float32, 1.5e-2, 1.5e-2)
    # bf16 logits: raw-dtype row max + single f32 cast, MXU lane-reduce path.
    _run_case("bf16_v256", k3, 2, 8, 256, jnp.bfloat16, 1.5e-2, 1.5e-2)
    print("KERNEL_OK")
</pallas_src>

<mosaic_0001>
module attributes {stable_mosaic.version = 11 : i64} {
  func.func @_ce_partial_kernel(%arg0: i32, %arg1: memref<16x32xf32, #tpu.memory_space<vmem>>, %arg2: memref<16x1xi32, #tpu.memory_space<vmem>>, %arg3: memref<1x1x1xf32, #tpu.memory_space<vmem>>) attributes {dimension_semantics = [#tpu.dimension_semantics<parallel>], iteration_bounds = array<i64: 1>, scalar_prefetch = 0 : i64, scratch_operands = 0 : i64, tpu.core_type = #tpu.core_type<tc>, window_params = [{transform_indices = @transform_0, window_bounds = array<i64: 16, 32>}, {transform_indices = @transform_1, window_bounds = array<i64: 16, 1>}, {transform_indices = @transform_2, window_bounds = array<i64: 1, 1, 1>}]} {
    %c0 = arith.constant 0 : index
    %c0_0 = arith.constant 0 : index
    %0 = vector.load %arg1[%c0, %c0_0] : memref<16x32xf32, #tpu.memory_space<vmem>>, vector<16x32xf32>
    %cst = arith.constant dense<0xFF800000> : vector<16xf32>
    %1 = vector.multi_reduction <maximumf>, %0, %cst [1] : vector<16x32xf32> to vector<16xf32>
    %2 = vector.shape_cast %1 : vector<16xf32> to vector<16x1xf32>
    %3 = vector.broadcast %2 : vector<16x1xf32> to vector<16x32xf32>
    %4 = arith.subf %0, %3 : vector<16x32xf32>
    %c0_1 = arith.constant 0 : index
    %c0_2 = arith.constant 0 : index
    %5 = vector.load %arg2[%c0_1, %c0_2] : memref<16x1xi32, #tpu.memory_space<vmem>>, vector<16x1xi32>
    %6 = tpu.iota {dimensions = array<i32: 1>} : vector<16x32xi32>
    %7 = math.exp %4 : vector<16x32xf32>
    %8 = vector.broadcast %5 : vector<16x1xi32> to vector<16x32xi32>
    %9 = arith.cmpi eq, %6, %8 : vector<16x32xi32>
    %cst_3 = arith.constant 0.000000e+00 : f32
    %10 = vector.broadcast %cst_3 : f32 to vector<16x32xf32>
    %11 = arith.select %9, %4, %10 : vector<16x32xi1>, vector<16x32xf32>
    %cst_4 = arith.constant dense<0.000000e+00> : vector<16xf32>
    %12 = vector.multi_reduction <add>, %7, %cst_4 [1] : vector<16x32xf32> to vector<16xf32>
    %13 = vector.shape_cast %12 : vector<16xf32> to vector<16x1xf32>
    %cst_5 = arith.constant dense<0.000000e+00> : vector<16xf32>
    %14 = vector.multi_reduction <add>, %11, %cst_5 [1] : vector<16x32xf32> to vector<16xf32>
    %15 = vector.shape_cast %14 : vector<16xf32> to vector<16x1xf32>
    %16 = math.log %13 : vector<16x1xf32>
    %17 = arith.subf %16, %15 : vector<16x1xf32>
    %cst_6 = arith.constant dense<0.000000e+00> : vector<1xf32>
    %18 = vector.multi_reduction <add>, %17, %cst_6 [0] : vector<16x1xf32> to vector<1xf32>
    %19 = vector.shape_cast %18 : vector<1xf32> to vector<1x1xf32>
    %c0_7 = arith.constant 0 : index
    %c0_8 = arith.constant 0 : index
    %c0_9 = arith.constant 0 : index
    %20 = vector.load %arg3[%c0_7, %c0_8, %c0_9] : memref<1x1x1xf32, #tpu.memory_space<vmem>>, vector<1x1x1xf32>
    %21 = vector.shape_cast %20 : vector<1x1x1xf32> to vector<1x1xf32>
    %22 = vector.shape_cast %19 : vector<1x1xf32> to vector<1x1x1xf32>
    tpu.vector_store %arg3[%c0_7, %c0_8, %c0_9], %22 {strides = array<i32>} : memref<1x1x1xf32, #tpu.memory_space<vmem>>, vector<1x1x1xf32>,
    return
  }
  func.func @transform_0(%arg0: i32) -> (i32, i32) {
    %c0_i32 = arith.constant 0 : i32
    %c0_i32_0 = arith.constant 0 : i32
    return %arg0, %c0_i32 : i32, i32
  }
  func.func @transform_1(%arg0: i32) -> (i32, i32) {
    %c0_i32 = arith.constant 0 : i32
    %c0_i32_0 = arith.constant 0 : i32
    return %arg0, %c0_i32 : i32, i32
  }
  func.func @transform_2(%arg0: i32) -> (i32, i32, i32) {
    %c0_i32 = arith.constant 0 : i32
    %c0_i32_0 = arith.constant 0 : i32
    %c0_i32_1 = arith.constant 0 : i32
    return %arg0, %c0_i32, %c0_i32_0 : i32, i32, i32
  }
}

</mosaic_0001>

<llo_original>
// kernel: language_model_criterion.1
$region0: #{language_model_criterion.1}
  #allocation0 [shape = 'u32[]', space=smem, size = 0x4, offset = 0x4, fixed_abs, tag = 'smem constant byte address 0x4 - core index']
  #allocation1 [shape = 'u32[144,128]{1,0:T(1,128)}', space=vmem, size = 0x12000, scoped, tag = 'internal scratch']
  %s0 = inlined_call_operand.vmem [shape: f32[16,32], index: 0, kind: input, shape index: {}]
  %s1 = inlined_call_operand.vmem [shape: s32[16,1], index: 1, kind: input, shape index: {}]
  %s2 = inlined_call_operand.hbm [shape: f32[1,1,1], index: 2, kind: output, shape index: {}]
  %s3 = sld [smem:[#allocation0]]
  $region18: #{language_model_criterion.1} parent=0
    _
  %s5 = ssub.s32 1, %s3
  %s6 = scalar_select 0, %s5, %s3
  $region1: #{language_model_criterion.1} parent=0
    #allocation2 [shape = 'u8[512]{0}', space=vmem, size = 0x400, scoped, tag = 'output window, operand 0, single buffered']
    #allocation3 [shape = 's32[1]{0}', space=sflag, size = 0x4, scoped, tag = 'scoped memory for language_model_criterion.1']
    %7 = vsyncpa [#allocation3], 0
    // Predicated region
    $region2: #{language_model_criterion.1} parent=1 // pred_check
      _
    $region3: #{language_model_criterion.1} parent=1 // pred_check_branch
      %9 = sbr.rel (0) target = $region5
    $region4: #{language_model_criterion.1} parent=1 // pred_region
      _
    $region5: #{language_model_criterion.1} parent=1 // pred_fallthru
      _
    // Predicated region
    $region6: #{language_model_criterion.1} parent=1 // pred_check
      _
    $region7: #{language_model_criterion.1} parent=1 // pred_check_branch
      %11 = sbr.rel (0) target = $region9
    $region8: #{language_model_criterion.1} parent=1 // pred_region
      _
    $region9: #{language_model_criterion.1} parent=1 // pred_fallthru
      _
    %v12 = vld [vmem:[%s0] sm:$0xff]
    %v13 = vld [vmem:[%s0 + $0x8] sm:$0xff]
    %vm14 = vcmask 261120
    %v15 = vsel %vm14, %v12, -inf
    %16 = vmax.xlane.f32.xlu0 %v15
    %v17 = vpop.xlane.xlu0 %16
    %v18 = vsel %vm14, %v13, -inf
    %19 = vmax.xlane.f32.xlu0 %v18
    %v20 = vpop.xlane.xlu0 %19
    %v21 = vsub.f32 %v12, %v17
    %v22 = vsub.f32 %v13, %v20
    %v23 = vld [vmem:[%s1] sm:$0xff]
    %v24 = vld [vmem:[%s1 + $0x8] sm:$0xff]
    %v25 = vlaneseq
    %v26 = vand.u32 %v25, 127
    %v27 = vmul.f32 %v21, 1.442695
    %v28 = vpow.pop %v27
    %v29 = vmul.f32 %v22, 1.442695
    %v30 = vpow.pop %v29
    %31 = vset.pattern.permute.xlu0 0
    %32 = vperm.xlu0 %31, %v23
    %v33 = vpop.permute.xlu0 %32
    %34 = vset.pattern.permute.xlu0 0
    %35 = vperm.xlu0 %34, %v24
    %v36 = vpop.permute.xlu0 %35
    %vm37 = vcmp.eq.s32.totalorder %v26, %v33
    %vm38 = vcmp.eq.s32.totalorder %v26, %v36
    %v39 = vsel %vm37, %v21, 0.0
    %v40 = vsel %vm38, %v22, 0.0
    %v41 = vsel %vm14, %v28, 0.0
    %42 = vadd.xlane.f32.xlu0 %v41
    %v43 = vpop.xlane.xlu0 %42
    %v44 = vsel %vm14, %v30, 0.0
    %45 = vadd.xlane.f32.xlu0 %v44
    %v46 = vpop.xlane.xlu0 %45
    %v47 = vsel %vm14, %v39, 0.0
    %48 = vadd.xlane.f32.xlu0 %v47
    %v49 = vpop.xlane.xlu0 %48
    %v50 = vsel %vm14, %v40, 0.0
    %51 = vadd.xlane.f32.xlu0 %v50
    %v52 = vpop.xlane.xlu0 %51
    %v53 = vlog2.pop %v43
    %v54 = vmul.f32 %v53, 0.6931472
    %v55 = vlog2.pop %v46
    %v56 = vmul.f32 %v55, 0.6931472
    %v57 = vsub.f32 %v54, %v49
    %v58 = vsub.f32 %v56, %v52
    %v59 = vadd.f32 %v57, %v58
    %v60 = vrot.slane %v59, 4
    %v61 = vadd.f32 %v59, %v60
    %v62 = vrot.slane %v61, 2
    %v63 = vadd.f32 %v61, %v62
    %v64 = vrot.slane %v63, 1
    %v65 = vadd.f32 %v63, %v64
    %vm66 = vcmask 0
    %67 = vst.msk [vmem:[#allocation2] sm:$0x1] %vm66, %v65
    // Predicated region
    $region10: #{language_model_criterion.1} parent=1 // pred_check
      _
    $region11: #{language_model_criterion.1} parent=1 // pred_check_branch
      %69 = sbr.rel (0) target = $region13
    $region12: #{language_model_criterion.1} parent=1 // pred_region
      %s71 = ssub.s32 16, 16
      %72 = vsyncadd [#allocation3], %s71
      %s74 = sshll.u32 [#allocation2], 4
      %s75 = int_to_ptr.vmem [resolvable:$true] %s74
      %77 = dma.vmem_to_hbm [thread:$0]  %s75, 16, %s2, [#allocation3]
    $region13: #{language_model_criterion.1} parent=1 // pred_fallthru
      _
    // Predicated region
    $region14: #{language_model_criterion.1} parent=1 // pred_check
      _
    $region15: #{language_model_criterion.1} parent=1 // pred_check_branch
      %79 = sbr.rel (0) target = $region17
    $region16: #{language_model_criterion.1} parent=1 // pred_region
      %80 = dma.done [#allocation3], 16
    $region17: #{language_model_criterion.1} parent=1 // pred_fallthru
      _
    %81 = vsyncpa [#allocation3], 1

</llo_original>
